<compile_context>
chip_gen: v7x
topology: tpu7x:2x2x1
jax: 0.10.0
libtpu: 0.0.40
codegen_flags: <defaults>
</compile_context>

<pallas_src>
import functools

import jax
import jax.numpy as jnp
from jax.experimental import pallas as pl
from jax.experimental.pallas import tpu as pltpu

HIDDEN = 256


def _round_up(x, m):
    return (x + m - 1) // m * m


def _critic_kernel(xu_ref, w1_ref, b1_ref, w2_ref, b2_ref, w3_ref, b3_ref,
                   out_ref):
    """One batch tile: xu -> [q1 | q2] written as a single (tile_b, 2) slab."""
    xu = xu_ref[...]                                  # (tile_b, D), bf16

    # Fused first layer of both heads: a single MXU push (no split-K).
    acc1 = jnp.dot(xu, w1_ref[...], preferred_element_type=jnp.float32)
    h1 = jnp.maximum(acc1 + b1_ref[...], 0.0).astype(jnp.bfloat16)  # (tile_b, 2H)
    h1a = h1[:, :HIDDEN]                              # aligned 256-lane slices
    h1b = h1[:, HIDDEN:]

    # Second layers (one 256x256 matmul per head); epilogues in f32 (v5e-safe).
    h2a = jnp.maximum(
        jnp.dot(h1a, w2_ref[0], preferred_element_type=jnp.float32)
        + b2_ref[:, :HIDDEN], 0.0)
    h2b = jnp.maximum(
        jnp.dot(h1b, w2_ref[1], preferred_element_type=jnp.float32)
        + b2_ref[:, HIDDEN:], 0.0)

    # Final 256 -> 1 layers as elementwise multiply + lane reduction (avoids
    # degenerate N=1 MXU matmuls); all f32.
    q1 = jnp.sum(h2a * w3_ref[0:1, :], axis=-1, keepdims=True)      # (tile_b, 1)
    q2 = jnp.sum(h2b * w3_ref[1:2, :], axis=-1, keepdims=True)      # (tile_b, 1)

    # Single store of both heads.
    out_ref[...] = jnp.concatenate([q1, q2], axis=-1) + b3_ref[...]


def pack_critic_params(params):
    """One-time packing of the raw per-head params into kernel operands.

    params: dict q1/q2 -> (W1, b1, W2, b2, W3, b3); W as (in, out), b as (1, out).
    Do this ONCE (e.g. right after init / each optimizer step), not per forward.
    """
    (w1a, b1a, w2a, b2a, w3a, b3a) = params["q1"]
    (w1b, b1b, w2b, b2b, w3b, b3b) = params["q2"]
    return {
        # Fused first layers of both heads: (D, 2H), bf16 MXU operand.
        "w1": jnp.concatenate([w1a, w1b], axis=1).astype(jnp.bfloat16),
        "b1": jnp.concatenate([b1a, b1b], axis=1).astype(jnp.float32),   # (1, 2H)
        # Second layers stacked: (2, H, H), bf16 MXU operand.
        "w2": jnp.stack([w2a, w2b], axis=0).astype(jnp.bfloat16),
        "b2": jnp.concatenate([b2a, b2b], axis=1).astype(jnp.float32),   # (1, 2H)
        # Final layers as rows: (2, H) f32 (elementwise path, stays f32).
        "w3": jnp.concatenate([w3a.reshape(1, HIDDEN),
                               w3b.reshape(1, HIDDEN)], axis=0).astype(jnp.float32),
        "b3": jnp.concatenate([b3a, b3b], axis=1).astype(jnp.float32),   # (1, 2)
    }


@functools.partial(jax.jit, static_argnames=("tile_b_max",))
def critic_forward(obs, act, packed, *, tile_b_max=512):
    """obs: (B, obs_dim) f32, act: (B, act_dim) f32, packed: pack_critic_params()."""
    B = obs.shape[0]
    D = obs.shape[1] + act.shape[1]

    # Tiny pre-concatenated bf16 xu buffer (D bf16/row): enables a single
    # layer-1 MXU push and halves the per-step streaming DMA.
    xu = jnp.concatenate([obs, act], axis=-1).astype(jnp.bfloat16)

    # Tile choice: guarantee >=2 grid steps whenever B > 8 (v7x: two
    # TensorCores over the "parallel" axis), capped at tile_b_max so big
    # batches still amortize the ~0.35us/step cost with few, fat steps.
    half_b = -(-B // 2)                                  # ceil(B / 2)
    tile_b = _round_up(min(tile_b_max, max(half_b, 8)), 8)
    B_pad = _round_up(B, tile_b)
    if B_pad != B:
        xu = jnp.pad(xu, ((0, B_pad - B), (0, 0)))
    grid = (B_pad // tile_b,)

    def const_spec(x):
        # Constant block index -> fetched once and reused across grid steps.
        return pl.BlockSpec(x.shape, lambda i: (0,) * x.ndim)

    grid_spec = pltpu.PrefetchScalarGridSpec(
        num_scalar_prefetch=0,
        grid=grid,
        in_specs=[pl.BlockSpec((tile_b, D), lambda i: (i, 0)),
                  const_spec(packed["w1"]), const_spec(packed["b1"]),
                  const_spec(packed["w2"]), const_spec(packed["b2"]),
                  const_spec(packed["w3"]), const_spec(packed["b3"])],
        out_specs=pl.BlockSpec((tile_b, 2), lambda i: (i, 0)),
    )

    out = pl.pallas_call(
        _critic_kernel,
        out_shape=jax.ShapeDtypeStruct((B_pad, 2), jnp.float32),
        grid_spec=grid_spec,
        compiler_params=pltpu.CompilerParams(
            dimension_semantics=("parallel",)),
    )(xu, packed["w1"], packed["b1"], packed["w2"], packed["b2"],
      packed["w3"], packed["b3"])

    out = out[:B]
    return out[:, 0:1], out[:, 1:2]


def init_critic_params(key, obs_dim, act_dim):
    """Deterministic init mimicking torch.nn.Linear default U(-1/sqrt(fan_in), +)."""
    in_dim = obs_dim + act_dim
    dims = [(in_dim, HIDDEN), (HIDDEN, HIDDEN), (HIDDEN, 1)]

    def init_mlp(k):
        layers = []
        for (fan_in, fan_out) in dims:
            k, kw, kb = jax.random.split(k, 3)
            bound = 1.0 / jnp.sqrt(float(fan_in))
            w = jax.random.uniform(kw, (fan_in, fan_out), jnp.float32, -bound, bound)
            b = jax.random.uniform(kb, (1, fan_out), jnp.float32, -bound, bound)
            layers += [w, b]
        return tuple(layers)

    k1, k2 = jax.random.split(key)
    return {"q1": init_mlp(k1), "q2": init_mlp(k2)}


def _reference_forward(obs, act, params, *, matmul_dtype=jnp.float32):
    """Pure-JAX reference; matmul_dtype=bfloat16 mirrors the kernel's precision."""
    xu = jnp.concatenate([obs, act], axis=-1)

    def mm(x, w):
        return jnp.dot(x.astype(matmul_dtype), w.astype(matmul_dtype),
                       preferred_element_type=jnp.float32)

    def mlp(p):
        w1, b1, w2, b2, w3, b3 = p
        h = jnp.maximum(mm(xu, w1) + b1, 0.0)
        h = jnp.maximum(mm(h, w2) + b2, 0.0)
        return h.astype(jnp.float32) @ w3 + b3      # last layer in f32 (like kernel)

    return mlp(params["q1"]), mlp(params["q2"])


if __name__ == "__main__":
    obs_dim, act_dim, batch = 16, 4, 16

    key = jax.random.PRNGKey(0)
    k_obs, k_act, k_params = jax.random.split(key, 3)
    obs = jax.random.normal(k_obs, (batch, obs_dim), jnp.float32)
    act = jax.random.normal(k_act, (batch, act_dim), jnp.float32)
    params = init_critic_params(k_params, obs_dim, act_dim)
    packed = pack_critic_params(params)          # one-time weight packing

    q1, q2 = critic_forward(obs, act, packed)
    jax.block_until_ready((q1, q2))
    assert q1.shape == (batch, 1) and q2.shape == (batch, 1)

    # Tight check vs a reference that mirrors the kernel's bf16-operand /
    # f32-accumulate matmul precision.
    r1, r2 = _reference_forward(obs, act, params, matmul_dtype=jnp.bfloat16)
    assert jnp.allclose(q1, r1, atol=1e-3, rtol=1e-3)
    assert jnp.allclose(q2, r2, atol=1e-3, rtol=1e-3)

    # Loose check vs full-f32 math (original PyTorch semantics).
    f1, f2 = _reference_forward(obs, act, params, matmul_dtype=jnp.float32)
    assert jnp.allclose(q1, f1, atol=5e-2, rtol=5e-2)
    assert jnp.allclose(q2, f2, atol=5e-2, rtol=5e-2)

    # Ragged batch (exercises the padding path).
    p1, p2 = critic_forward(obs[:13], act[:13], packed)
    jax.block_until_ready((p1, p2))
    assert jnp.allclose(p1, q1[:13], atol=1e-5, rtol=1e-5)
    assert jnp.allclose(p2, q2[:13], atol=1e-5, rtol=1e-5)

    # Tiny-tile multi-step grid path.
    t1, t2 = critic_forward(obs, act, packed, tile_b_max=8)
    jax.block_until_ready((t1, t2))
    assert jnp.allclose(t1, q1, atol=1e-5, rtol=1e-5)
    assert jnp.allclose(t2, q2, atol=1e-5, rtol=1e-5)

    print("KERNEL_OK")
</pallas_src>

<mosaic_0001>
module attributes {stable_mosaic.version = 11 : i64} {
  func.func @_critic_kernel(%arg0: i32, %arg1: memref<8x20xbf16, #tpu.memory_space<vmem>>, %arg2: memref<20x512xbf16, #tpu.memory_space<vmem>>, %arg3: memref<1x512xf32, #tpu.memory_space<vmem>>, %arg4: memref<2x256x256xbf16, #tpu.memory_space<vmem>>, %arg5: memref<1x512xf32, #tpu.memory_space<vmem>>, %arg6: memref<2x256xf32, #tpu.memory_space<vmem>>, %arg7: memref<1x2xf32, #tpu.memory_space<vmem>>, %arg8: memref<8x2xf32, #tpu.memory_space<vmem>>) attributes {dimension_semantics = [#tpu.dimension_semantics<parallel>], iteration_bounds = array<i64: 2>, scalar_prefetch = 0 : i64, scratch_operands = 0 : i64, tpu.core_type = #tpu.core_type<tc>, window_params = [{transform_indices = @transform_0, window_bounds = array<i64: 8, 20>}, {pipeline_mode = #tpu.pipeline_mode<synchronous>, transform_indices = @transform_1, window_bounds = array<i64: 20, 512>}, {pipeline_mode = #tpu.pipeline_mode<synchronous>, transform_indices = @transform_2, window_bounds = array<i64: 1, 512>}, {pipeline_mode = #tpu.pipeline_mode<synchronous>, transform_indices = @transform_3, window_bounds = array<i64: 2, 256, 256>}, {pipeline_mode = #tpu.pipeline_mode<synchronous>, transform_indices = @transform_4, window_bounds = array<i64: 1, 512>}, {pipeline_mode = #tpu.pipeline_mode<synchronous>, transform_indices = @transform_5, window_bounds = array<i64: 2, 256>}, {pipeline_mode = #tpu.pipeline_mode<synchronous>, transform_indices = @transform_6, window_bounds = array<i64: 1, 2>}, {transform_indices = @transform_7, window_bounds = array<i64: 8, 2>}]} {
    %c0 = arith.constant 0 : index
    %c0_0 = arith.constant 0 : index
    %0 = vector.load %arg1[%c0, %c0_0] : memref<8x20xbf16, #tpu.memory_space<vmem>>, vector<8x20xbf16>
    %c0_1 = arith.constant 0 : index
    %c0_2 = arith.constant 0 : index
    %1 = vector.load %arg2[%c0_1, %c0_2] : memref<20x512xbf16, #tpu.memory_space<vmem>>, vector<20x512xbf16>
    %cst = arith.constant dense<0.000000e+00> : vector<8x512xf32>
    %2 = tpu.matmul %0, %1, %cst {dimension_numbers = #tpu.dot_dimension_numbers<[1], [0], [0], [1], [0, 0, 1, 1], [], []>} : vector<8x20xbf16>, vector<20x512xbf16>, vector<8x512xf32> -> vector<8x512xf32>
    %c0_3 = arith.constant 0 : index
    %c0_4 = arith.constant 0 : index
    %3 = vector.load %arg3[%c0_3, %c0_4] : memref<1x512xf32, #tpu.memory_space<vmem>>, vector<1x512xf32>
    %4 = vector.broadcast %3 : vector<1x512xf32> to vector<8x512xf32>
    %5 = arith.addf %2, %4 : vector<8x512xf32>
    %cst_5 = arith.constant 0.000000e+00 : f32
    %6 = vector.broadcast %cst_5 : f32 to vector<8x512xf32>
    %7 = arith.maximumf %5, %6 : vector<8x512xf32>
    %8 = arith.truncf %7 : vector<8x512xf32> to vector<8x512xbf16>
    %9 = vector.extract_strided_slice %8 {offsets = [0, 0], sizes = [8, 256], strides = [1, 1]} : vector<8x512xbf16> to vector<8x256xbf16>
    %10 = vector.extract_strided_slice %8 {offsets = [0, 256], sizes = [8, 256], strides = [1, 1]} : vector<8x512xbf16> to vector<8x256xbf16>
    %c0_6 = arith.constant 0 : index
    %c0_7 = arith.constant 0 : index
    %c0_8 = arith.constant 0 : index
    %11 = vector.load %arg4[%c0_6, %c0_7, %c0_8] : memref<2x256x256xbf16, #tpu.memory_space<vmem>>, vector<1x256x256xbf16>
    %12 = vector.shape_cast %11 : vector<1x256x256xbf16> to vector<256x256xbf16>
    %cst_9 = arith.constant dense<0.000000e+00> : vector<8x256xf32>
    %13 = tpu.matmul %9, %12, %cst_9 {dimension_numbers = #tpu.dot_dimension_numbers<[1], [0], [0], [1], [0, 0, 1, 1], [], []>} : vector<8x256xbf16>, vector<256x256xbf16>, vector<8x256xf32> -> vector<8x256xf32>
    %c0_10 = arith.constant 0 : index
    %c0_11 = arith.constant 0 : index
    %14 = vector.load %arg5[%c0_10, %c0_11] : memref<1x512xf32, #tpu.memory_space<vmem>>, vector<1x256xf32>
    %15 = vector.broadcast %14 : vector<1x256xf32> to vector<8x256xf32>
    %16 = arith.addf %13, %15 : vector<8x256xf32>
    %cst_12 = arith.constant 0.000000e+00 : f32
    %17 = vector.broadcast %cst_12 : f32 to vector<8x256xf32>
    %18 = arith.maximumf %16, %17 : vector<8x256xf32>
    %c1 = arith.constant 1 : index
    %c0_13 = arith.constant 0 : index
    %c0_14 = arith.constant 0 : index
    %19 = vector.load %arg4[%c1, %c0_13, %c0_14] : memref<2x256x256xbf16, #tpu.memory_space<vmem>>, vector<1x256x256xbf16>
    %20 = vector.shape_cast %19 : vector<1x256x256xbf16> to vector<256x256xbf16>
    %cst_15 = arith.constant dense<0.000000e+00> : vector<8x256xf32>
    %21 = tpu.matmul %10, %20, %cst_15 {dimension_numbers = #tpu.dot_dimension_numbers<[1], [0], [0], [1], [0, 0, 1, 1], [], []>} : vector<8x256xbf16>, vector<256x256xbf16>, vector<8x256xf32> -> vector<8x256xf32>
    %c0_16 = arith.constant 0 : index
    %c256 = arith.constant 256 : index
    %22 = vector.load %arg5[%c0_16, %c256] : memref<1x512xf32, #tpu.memory_space<vmem>>, vector<1x256xf32>
    %23 = vector.broadcast %22 : vector<1x256xf32> to vector<8x256xf32>
    %24 = arith.addf %21, %23 : vector<8x256xf32>
    %cst_17 = arith.constant 0.000000e+00 : f32
    %25 = vector.broadcast %cst_17 : f32 to vector<8x256xf32>
    %26 = arith.maximumf %24, %25 : vector<8x256xf32>
    %c0_18 = arith.constant 0 : index
    %c0_19 = arith.constant 0 : index
    %27 = vector.load %arg6[%c0_18, %c0_19] : memref<2x256xf32, #tpu.memory_space<vmem>>, vector<1x256xf32>
    %28 = vector.broadcast %27 : vector<1x256xf32> to vector<8x256xf32>
    %29 = arith.mulf %18, %28 : vector<8x256xf32>
    %cst_20 = arith.constant dense<0.000000e+00> : vector<8xf32>
    %30 = vector.multi_reduction <add>, %29, %cst_20 [1] : vector<8x256xf32> to vector<8xf32>
    %31 = vector.shape_cast %30 : vector<8xf32> to vector<8x1xf32>
    %c1_21 = arith.constant 1 : index
    %c0_22 = arith.constant 0 : index
    %32 = vector.load %arg6[%c1_21, %c0_22] : memref<2x256xf32, #tpu.memory_space<vmem>>, vector<1x256xf32>
    %33 = vector.broadcast %32 : vector<1x256xf32> to vector<8x256xf32>
    %34 = arith.mulf %26, %33 : vector<8x256xf32>
    %cst_23 = arith.constant dense<0.000000e+00> : vector<8xf32>
    %35 = vector.multi_reduction <add>, %34, %cst_23 [1] : vector<8x256xf32> to vector<8xf32>
    %36 = vector.shape_cast %35 : vector<8xf32> to vector<8x1xf32>
    %37 = tpu.concatenate %31, %36 in 1 : vector<8x1xf32>, vector<8x1xf32> -> vector<8x2xf32>
    %c0_24 = arith.constant 0 : index
    %c0_25 = arith.constant 0 : index
    %38 = vector.load %arg7[%c0_24, %c0_25] : memref<1x2xf32, #tpu.memory_space<vmem>>, vector<1x2xf32>
    %39 = vector.broadcast %38 : vector<1x2xf32> to vector<8x2xf32>
    %40 = arith.addf %37, %39 : vector<8x2xf32>
    %c0_26 = arith.constant 0 : index
    %c0_27 = arith.constant 0 : index
    %41 = vector.load %arg8[%c0_26, %c0_27] : memref<8x2xf32, #tpu.memory_space<vmem>>, vector<8x2xf32>
    tpu.vector_store %arg8[%c0_26, %c0_27], %40 {strides = array<i32>} : memref<8x2xf32, #tpu.memory_space<vmem>>, vector<8x2xf32>,
    return
  }
  func.func @transform_0(%arg0: i32) -> (i32, i32) {
    %c0_i32 = arith.constant 0 : i32
    %c0_i32_0 = arith.constant 0 : i32
    return %arg0, %c0_i32 : i32, i32
  }
  func.func @transform_1(%arg0: i32) -> (i32, i32) {
    %c0_i32 = arith.constant 0 : i32
    %c0_i32_0 = arith.constant 0 : i32
    %c0_i32_1 = arith.constant 0 : i32
    return %c0_i32, %c0_i32_0 : i32, i32
  }
  func.func @transform_2(%arg0: i32) -> (i32, i32) {
    %c0_i32 = arith.constant 0 : i32
    %c0_i32_0 = arith.constant 0 : i32
    %c0_i32_1 = arith.constant 0 : i32
    return %c0_i32, %c0_i32_0 : i32, i32
  }
  func.func @transform_3(%arg0: i32) -> (i32, i32, i32) {
    %c0_i32 = arith.constant 0 : i32
    %c0_i32_0 = arith.constant 0 : i32
    %c0_i32_1 = arith.constant 0 : i32
    %c0_i32_2 = arith.constant 0 : i32
    return %c0_i32, %c0_i32_0, %c0_i32_1 : i32, i32, i32
  }
  func.func @transform_4(%arg0: i32) -> (i32, i32) {
    %c0_i32 = arith.constant 0 : i32
    %c0_i32_0 = arith.constant 0 : i32
    %c0_i32_1 = arith.constant 0 : i32
    return %c0_i32, %c0_i32_0 : i32, i32
  }
  func.func @transform_5(%arg0: i32) -> (i32, i32) {
    %c0_i32 = arith.constant 0 : i32
    %c0_i32_0 = arith.constant 0 : i32
    %c0_i32_1 = arith.constant 0 : i32
    return %c0_i32, %c0_i32_0 : i32, i32
  }
  func.func @transform_6(%arg0: i32) -> (i32, i32) {
    %c0_i32 = arith.constant 0 : i32
    %c0_i32_0 = arith.constant 0 : i32
    %c0_i32_1 = arith.constant 0 : i32
    return %c0_i32, %c0_i32_0 : i32, i32
  }
  func.func @transform_7(%arg0: i32) -> (i32, i32) {
    %c0_i32 = arith.constant 0 : i32
    %c0_i32_0 = arith.constant 0 : i32
    return %arg0, %c0_i32 : i32, i32
  }
}

</mosaic_0001>

<llo_original>
// kernel: critic_forward.1
$region0: #{critic_forward.1}
  #allocation0 [shape = 'u32[]', space=smem, size = 0x4, offset = 0x4, fixed_abs, tag = 'smem constant byte address 0x4 - core index']
  #allocation1 [shape = 'u32[144,128]{1,0:T(1,128)}', space=vmem, size = 0x12000, scoped, tag = 'internal scratch']
  %s0 = inlined_call_operand.vmem [shape: bf16[16,20], index: 0, kind: input, shape index: {}]
  %s1 = inlined_call_operand.vmem [shape: bf16[20,512], index: 1, kind: input, shape index: {}]
  %s2 = inlined_call_operand.vmem [shape: f32[1,512], index: 2, kind: input, shape index: {}]
  %s3 = inlined_call_operand.hbm [shape: bf16[2,256,256], index: 3, kind: input, shape index: {}]
  %s4 = inlined_call_operand.vmem [shape: f32[1,512], index: 4, kind: input, shape index: {}]
  %s5 = inlined_call_operand.vmem [shape: f32[2,256], index: 5, kind: input, shape index: {}]
  %s6 = inlined_call_operand.vmem [shape: f32[1,2], index: 6, kind: input, shape index: {}]
  %s7 = inlined_call_operand.vmem [shape: f32[16,2], index: 7, kind: output, shape index: {}]
  %s8 = sld [smem:[#allocation0]]
  $region65: #{critic_forward.1} parent=0
    _
  %s10 = ssub.s32 1, %s8
  %s11 = scalar_select 0, %s10, %s8
  $region1: #{critic_forward.1} parent=0
    #allocation2 [shape = 'u8[262144]{0}', space=vmem, size = 0x40000, scoped, tag = 'input window, operand 3, single buffered']
    #allocation3 [shape = 's32[2]{0}', space=sflag, size = 0x8, scoped, tag = 'scoped memory for critic_forward.1']
    %12 = vsyncpa [#allocation3], 0
    loop: start=0, step=1, limit=4
    $region2: #{critic_forward.1} parent=1 // loop_pre_header
      _
    $region3: #{critic_forward.1} parent=1 // loop_header
      %s14 = sphi 0, %s18
      %p15 = scmp.ge.s32.totalorder %s14, 4
      %s24 = sphi 0, %s26
      %s27 = sphi 0, %s24
      %s28 = sphi 0, %s27
      %s44 = sphi 0, %s28
      %s48 = sphi 0, %s48
      %s50 = sphi 0, %s48
      %s51 = sphi 0, %s50
      %s65 = sphi 0, %s51
      %s69 = sphi 0, %s69
      %s71 = sphi 0, %s69
      %s72 = sphi 0, %s71
      %s86 = sphi 0, %s72
      %s90 = sphi 0, %s90
      %s92 = sphi 0, %s90
      %s93 = sphi 0, %s92
      %s107 = sphi 0, %s93
      %s111 = sphi 0, %s111
      %s113 = sphi 0, %s111
      %s114 = sphi 0, %s113
      %s128 = sphi 0, %s114
      %s132 = sphi 0, %s132
      %s134 = sphi 0, %s132
      %s135 = sphi 0, %s134
      %s149 = sphi 0, %s135
      %s153 = sphi 0, %s153
      %s155 = sphi 0, %s153
      %s156 = sphi 0, %s155
      %s170 = sphi 0, %s156
      %s176 = sphi 0, %s178
      %s179 = sphi 0, %s176
      %s180 = sphi 0, %s179
      %s196 = sphi 0, %s180
    $region4: #{critic_forward.1} parent=1 // loop_header_branch
      %17 = sbr.rel (%p15) target = $region8
    $region5: #{critic_forward.1} parent=1 // loop_body
      %s19 = ssub.s32 %s14, 1
      %s20 = ssub.s32 %s14, 2
      %s21 = sadd.s32 %s14, 1
      %s22 = ssub.s32 %s14, %s21
      %p23 = scmp.eq.s32.totalorder %s22, 0
      %s25 = sadd.s32 %s24, 1
      %s26 = scalar_select %p23, %s24, %s25
      %p29 = pneg %p23
      %p30 = scmp.eq.s32.totalorder %s14, 1
      %p31 = por %p29, %p30
      %p32 = scmp.ne.s32.totalorder %s24, %s27
      %p33 = scmp.eq.s32.totalorder %s14, 0
      %p34 = por %p32, %p33
      %p35 = scmp.ne.s32.totalorder %s24, %s27
      %p36 = scmp.eq.s32.totalorder %s19, 1
      %p37 = por %p35, %p36
      %p38 = scmp.ne.s32.totalorder %s27, %s28
      %p39 = scmp.eq.s32.totalorder %s19, 0
      %p40 = por %p38, %p39
      %p41 = scmp.ne.s32.totalorder %s27, %s28
      %p42 = scmp.eq.s32.totalorder %s20, 1
      %p43 = por %p41, %p42
      %p45 = scmp.ne.s32.totalorder %s28, %s44
      %p46 = scmp.eq.s32.totalorder %s20, 0
      %p47 = por %p45, %p46
      %s49 = sadd.s32 %s48, 1
      %p52 = scmp.eq.s32.totalorder %s14, 1
      %p53 = scmp.ne.s32.totalorder %s48, %s50
      %p54 = scmp.eq.s32.totalorder %s14, 0
      %p55 = por %p53, %p54
      %p56 = scmp.ne.s32.totalorder %s48, %s50
      %p57 = scmp.eq.s32.totalorder %s19, 1
      %p58 = por %p56, %p57
      %p59 = scmp.ne.s32.totalorder %s50, %s51
      %p60 = scmp.eq.s32.totalorder %s19, 0
      %p61 = por %p59, %p60
      %p62 = scmp.ne.s32.totalorder %s50, %s51
      %p63 = scmp.eq.s32.totalorder %s20, 1
      %p64 = por %p62, %p63
      %p66 = scmp.ne.s32.totalorder %s51, %s65
      %p67 = scmp.eq.s32.totalorder %s20, 0
      %p68 = por %p66, %p67
      %s70 = sadd.s32 %s69, 1
      %p73 = scmp.eq.s32.totalorder %s14, 1
      %p74 = scmp.ne.s32.totalorder %s69, %s71
      %p75 = scmp.eq.s32.totalorder %s14, 0
      %p76 = por %p74, %p75
      %p77 = scmp.ne.s32.totalorder %s69, %s71
      %p78 = scmp.eq.s32.totalorder %s19, 1
      %p79 = por %p77, %p78
      %p80 = scmp.ne.s32.totalorder %s71, %s72
      %p81 = scmp.eq.s32.totalorder %s19, 0
      %p82 = por %p80, %p81
      %p83 = scmp.ne.s32.totalorder %s71, %s72
      %p84 = scmp.eq.s32.totalorder %s20, 1
      %p85 = por %p83, %p84
      %p87 = scmp.ne.s32.totalorder %s72, %s86
      %p88 = scmp.eq.s32.totalorder %s20, 0
      %p89 = por %p87, %p88
      %s91 = sadd.s32 %s90, 1
      %p94 = scmp.eq.s32.totalorder %s14, 1
      %p95 = scmp.ne.s32.totalorder %s90, %s92
      %p96 = scmp.eq.s32.totalorder %s14, 0
      %p97 = por %p95, %p96
      %p98 = scmp.ne.s32.totalorder %s90, %s92
      %p99 = scmp.eq.s32.totalorder %s19, 1
      %p100 = por %p98, %p99
      %p101 = scmp.ne.s32.totalorder %s92, %s93
      %p102 = scmp.eq.s32.totalorder %s19, 0
      %p103 = por %p101, %p102
      %p104 = scmp.ne.s32.totalorder %s92, %s93
      %p105 = scmp.eq.s32.totalorder %s20, 1
      %p106 = por %p104, %p105
      %p108 = scmp.ne.s32.totalorder %s93, %s107
      %p109 = scmp.eq.s32.totalorder %s20, 0
      %p110 = por %p108, %p109
      %s112 = sadd.s32 %s111, 1
      %p115 = scmp.eq.s32.totalorder %s14, 1
      %p116 = scmp.ne.s32.totalorder %s111, %s113
      %p117 = scmp.eq.s32.totalorder %s14, 0
      %p118 = por %p116, %p117
      %p119 = scmp.ne.s32.totalorder %s111, %s113
      %p120 = scmp.eq.s32.totalorder %s19, 1
      %p121 = por %p119, %p120
      %p122 = scmp.ne.s32.totalorder %s113, %s114
      %p123 = scmp.eq.s32.totalorder %s19, 0
      %p124 = por %p122, %p123
      %p125 = scmp.ne.s32.totalorder %s113, %s114
      %p126 = scmp.eq.s32.totalorder %s20, 1
      %p127 = por %p125, %p126
      %p129 = scmp.ne.s32.totalorder %s114, %s128
      %p130 = scmp.eq.s32.totalorder %s20, 0
      %p131 = por %p129, %p130
      %s133 = sadd.s32 %s132, 1
      %p136 = scmp.eq.s32.totalorder %s14, 1
      %p137 = scmp.ne.s32.totalorder %s132, %s134
      %p138 = scmp.eq.s32.totalorder %s14, 0
      %p139 = por %p137, %p138
      %p140 = scmp.ne.s32.totalorder %s132, %s134
      %p141 = scmp.eq.s32.totalorder %s19, 1
      %p142 = por %p140, %p141
      %p143 = scmp.ne.s32.totalorder %s134, %s135
      %p144 = scmp.eq.s32.totalorder %s19, 0
      %p145 = por %p143, %p144
      %p146 = scmp.ne.s32.totalorder %s134, %s135
      %p147 = scmp.eq.s32.totalorder %s20, 1
      %p148 = por %p146, %p147
      %p150 = scmp.ne.s32.totalorder %s135, %s149
      %p151 = scmp.eq.s32.totalorder %s20, 0
      %p152 = por %p150, %p151
      %s154 = sadd.s32 %s153, 1
      %p157 = scmp.eq.s32.totalorder %s14, 1
      %p158 = scmp.ne.s32.totalorder %s153, %s155
      %p159 = scmp.eq.s32.totalorder %s14, 0
      %p160 = por %p158, %p159
      %p161 = scmp.ne.s32.totalorder %s153, %s155
      %p162 = scmp.eq.s32.totalorder %s19, 1
      %p163 = por %p161, %p162
      %p164 = scmp.ne.s32.totalorder %s155, %s156
      %p165 = scmp.eq.s32.totalorder %s19, 0
      %p166 = por %p164, %p165
      %p167 = scmp.ne.s32.totalorder %s155, %s156
      %p168 = scmp.eq.s32.totalorder %s20, 1
      %p169 = por %p167, %p168
      %p171 = scmp.ne.s32.totalorder %s156, %s170
      %p172 = scmp.eq.s32.totalorder %s20, 0
      %p173 = por %p171, %p172
      %s174 = ssub.s32 %s14, %s21
      %p175 = scmp.eq.s32.totalorder %s174, 0
      %s177 = sadd.s32 %s176, 1
      %s178 = scalar_select %p175, %s176, %s177
      %p181 = pneg %p175
      %p182 = scmp.eq.s32.totalorder %s14, 1
      %p183 = por %p181, %p182
      %p184 = scmp.ne.s32.totalorder %s176, %s179
      %p185 = scmp.eq.s32.totalorder %s14, 0
      %p186 = por %p184, %p185
      %p187 = scmp.ne.s32.totalorder %s176, %s179
      %p188 = scmp.eq.s32.totalorder %s19, 1
      %p189 = por %p187, %p188
      %p190 = scmp.ne.s32.totalorder %s179, %s180
      %p191 = scmp.eq.s32.totalorder %s19, 0
      %p192 = por %p190, %p191
      %p193 = scmp.ne.s32.totalorder %s179, %s180
      %p194 = scmp.eq.s32.totalorder %s20, 1
      %p195 = por %p193, %p194
      %p197 = scmp.ne.s32.totalorder %s180, %s196
      %p198 = scmp.eq.s32.totalorder %s20, 0
      %p199 = por %p197, %p198
      %p200 = scmp.le.s32.totalorder 1, %s14
      %p201 = scmp.lt.s32.totalorder %s14, 3
      %p202 = pnand %p200, %p201
      %p203 = pneg %p202
      // Predicated region
      $region9: #{critic_forward.1} parent=5 // pred_check
        _
      $region10: #{critic_forward.1} parent=5 // pred_check_branch
        %205 = sbr.rel (%p202) target = $region12
      $region11: #{critic_forward.1} parent=5 // pred_region
        %s206 = ssub.s32 %s14, 1
        // Predicated region
        $region13: #{critic_forward.1} parent=11 // pred_check
          %p207 = pneg %p61
        $region14: #{critic_forward.1} parent=11 // pred_check_branch
          %209 = sbr.rel (%p207) target = $region16
        $region15: #{critic_forward.1} parent=11 // pred_region
          _
        $region16: #{critic_forward.1} parent=11 // pred_fallthru
          _
        // Predicated region
        $region17: #{critic_forward.1} parent=11 // pred_check
          %p210 = pneg %p82
        $region18: #{critic_forward.1} parent=11 // pred_check_branch
          %212 = sbr.rel (%p210) target = $region20
        $region19: #{critic_forward.1} parent=11 // pred_region
          _
        $region20: #{critic_forward.1} parent=11 // pred_fallthru
          _
        // Predicated region
        $region21: #{critic_forward.1} parent=11 // pred_check
          %p213 = pneg %p103
        $region22: #{critic_forward.1} parent=11 // pred_check_branch
          %215 = sbr.rel (%p213) target = $region24
        $region23: #{critic_forward.1} parent=11 // pred_region
          %s217 = ssub.s32 8192, 8192
          %218 = vsyncadd [#allocation3], %s217
          %s219 = sshll.u32 [#allocation2], 4
          %s220 = int_to_ptr.vmem [resolvable:$true] %s219
          %225 = dma.hbm_to_vmem [thread:$0]  %s3, 8192, %s220, [#allocation3], 128, 128, 8
        $region24: #{critic_forward.1} parent=11 // pred_fallthru
          _
        // Predicated region
        $region25: #{critic_forward.1} parent=11 // pred_check
          %p226 = pneg %p124
        $region26: #{critic_forward.1} parent=11 // pred_check_branch
          %228 = sbr.rel (%p226) target = $region28
        $region27: #{critic_forward.1} parent=11 // pred_region
          _
        $region28: #{critic_forward.1} parent=11 // pred_fallthru
          _
        // Predicated region
        $region29: #{critic_forward.1} parent=11 // pred_check
          %p229 = pneg %p145
        $region30: #{critic_forward.1} parent=11 // pred_check_branch
          %231 = sbr.rel (%p229) target = $region32
        $region31: #{critic_forward.1} parent=11 // pred_region
          _
        $region32: #{critic_forward.1} parent=11 // pred_fallthru
          _
        // Predicated region
        $region33: #{critic_forward.1} parent=11 // pred_check
          %p232 = pneg %p166
        $region34: #{critic_forward.1} parent=11 // pred_check_branch
          %234 = sbr.rel (%p232) target = $region36
        $region35: #{critic_forward.1} parent=11 // pred_region
          _
        $region36: #{critic_forward.1} parent=11 // pred_fallthru
          _
      $region12: #{critic_forward.1} parent=5 // pred_fallthru
        _
      %p235 = scmp.lt.s32.totalorder %s14, 2
      // Predicated region
      $region37: #{critic_forward.1} parent=5 // pred_check
        %p236 = pneg %p235
      $region38: #{critic_forward.1} parent=5 // pred_check_branch
        %238 = sbr.rel (%p236) target = $region40
      $region39: #{critic_forward.1} parent=5 // pred_region
        // Predicated region
        $region41: #{critic_forward.1} parent=39 // pred_check
          %p239 = pneg %p34
        $region42: #{critic_forward.1} parent=39 // pred_check_branch
          %241 = sbr.rel (%p239) target = $region44
        $region43: #{critic_forward.1} parent=39 // pred_region
          %p242 = scmp.lt.s32.totalorder %s14, 1
          %s243 = scalar_select %p242, %s14, 1
          %s244 = smul.addr %s243, 4
          %s245 = scalar_lea.vmem %s0, %s244
        $region44: #{critic_forward.1} parent=39 // pred_fallthru
          _
      $region40: #{critic_forward.1} parent=5 // pred_fallthru
        _
      %p246 = scmp.le.s32.totalorder 1, %s14
      %p247 = scmp.lt.s32.totalorder %s14, 3
      %p248 = pnand %p246, %p247
      %p249 = pneg %p248
      // Predicated region
      $region45: #{critic_forward.1} parent=5 // pred_check
        _
      $region46: #{critic_forward.1} parent=5 // pred_check_branch
        %251 = sbr.rel (%p248) target = $region48
      $region47: #{critic_forward.1} parent=5 // pred_region
        %s252 = ssub.s32 %s14, 1
        // Predicated region
        $region49: #{critic_forward.1} parent=47 // pred_check
          %p253 = pneg %p103
        $region50: #{critic_forward.1} parent=47 // pred_check_branch
          %255 = sbr.rel (%p253) target = $region52
        $region51: #{critic_forward.1} parent=47 // pred_region
          %256 = dma.done [#allocation3], 8192
        $region52: #{critic_forward.1} parent=47 // pred_fallthru
          _
        %p257 = scmp.lt.s32.totalorder %s19, 1
        %s258 = scalar_select %p257, %s19, 1
        %s259 = smul.addr %s258, 4
        %s260 = scalar_lea.vmem %s0, %s259
        %p261 = pneg %p40
        %p262 = pneg %p37
        %p263 = pneg %p61
        %p264 = pneg %p58
        %p265 = pneg %p82
        %p266 = pneg %p79
        %p267 = pneg %p103
        %p268 = pneg %p100
        %p269 = pneg %p124
        %p270 = pneg %p121
        %p271 = pneg %p145
        %p272 = pneg %p142
        %p273 = pneg %p166
        %p274 = pneg %p163
        %p275 = pneg %p192
        %p276 = pneg %p189
        %p277 = scmp.lt.s32.totalorder %s19, 1
        %s278 = scalar_select %p277, %s19, 1
        %s279 = smul.addr %s278, 8
        %s280 = scalar_lea.vmem %s7, %s279
        %p281 = scmp.lt.s32.totalorder %s19, 1
        %s282 = scalar_select %p281, %s19, 1
        %s283 = smul.addr %s282, 4
        %s284 = scalar_lea.vmem %s0, %s283
        %p285 = scmp.lt.s32.totalorder %s19, 1
        %s286 = scalar_select %p285, %s19, 1
        %s287 = smul.addr %s286, 8
        %s288 = scalar_lea.vmem %s7, %s287
        %v290 = vld [vmem:[%s284] sm:$0xf]
        %v291 = vld [vmem:[%s1] sm:$0xff]
        %v292 = vld [vmem:[%s1 + $0x8] sm:$0xff]
        %v293 = vld [vmem:[%s1 + $0x10] sm:$0xff]
        %v294 = vld [vmem:[%s1 + $0x18] sm:$0xff]
        %v295 = vld [vmem:[%s1 + $0x20] sm:$0x33]
        %v296 = vld [vmem:[%s1 + $0x28] sm:$0x33]
        %v297 = vld [vmem:[%s2] sm:$0xf]
        %v299 = vlaneseq
        %v300 = vshrl.u32 %v299, 7
        %v301 = vsub.s32 0, %v300
        %v302 = vrot.slane %v297, %v301
        %v303 = vlaneseq
        %v304 = vshrl.u32 %v303, 7
        %v305 = vsub.s32 1, %v304
        %v306 = vrot.slane %v297, %v305
        %v307 = vlaneseq
        %v308 = vshrl.u32 %v307, 7
        %v309 = vsub.s32 2, %v308
        %v310 = vrot.slane %v297, %v309
        %v311 = vlaneseq
        %v312 = vshrl.u32 %v311, 7
        %v313 = vsub.s32 3, %v312
        %v314 = vrot.slane %v297, %v313
        %v325 = vunpack.c.l.b16 %v291
        %v326 = vunpack.c.h.b16 %v291
        %v327 = vunpack.c.l.b16 %v292
        %v328 = vunpack.c.h.b16 %v292
        %v329 = vunpack.c.l.b16 %v293
        %v330 = vunpack.c.h.b16 %v293
        %v331 = vunpack.c.l.b16 %v294
        %v332 = vunpack.c.h.b16 %v294
        %v333 = vunpack.c.l.b16 %v295
        %v334 = vunpack.c.h.b16 %v295
        %v335 = vunpack.c.l.b16 %v296
        %v336 = vunpack.c.h.b16 %v296
        %v337 = vpack.c.b16 %v329, %v325
        %v338 = vpack.c.b16 %v330, %v326
        %v339 = vpack.c.b16 %v331, %v327
        %v340 = vpack.c.b16 %v332, %v328
        %v341 = vpack.c.b16 %v333, %v333
        %v342 = vpack.c.b16 %v334, %v334
        %v343 = vpack.c.b16 %v335, %v335
        %v344 = vpack.c.b16 %v336, %v336
        %vm349 = vcmask 162816
        %v351 = vsel %vm349, %v290, 0
        %vm353 = vcmask 1041408
        %v355 = vsel %vm353, %v341, 0
        %v358 = vsel %vm353, %v342, 0
        %v361 = vsel %vm353, %v343, 0
        %v364 = vsel %vm353, %v344, 0
        %366 = vmatprep.subr.bf16.mxu0 %v338
        %367 = vmatpush1.bf16.msra.mxu0 %v337
        %368 = vmatprep.subr.bf16.mxu0 %v358
        %369 = vmatpush1.bf16.msra.mxu0 %v355
        %370 = vmatprep.subr.bf16.mxu0 0
        %371 = vmatpush1.bf16.msra.mxu0 0
        %372 = vmatprep.subr.bf16.mxu0 0
        %373 = vmatpush1.bf16.msra.mxu0 0
        %374 = vmatprep.subr.bf16.mxu0 0
        %375 = vmatpush1.bf16.msra.mxu0 0
        %376 = vmatprep.subr.bf16.mxu0 0
        %377 = vmatpush1.bf16.msra.mxu0 0
        %378 = vmatprep.subr.bf16.mxu0 0
        %379 = vmatpush1.bf16.msra.mxu0 0
        %380 = vmatprep.subr.bf16.mxu0 0
        %381 = vmatpush1.bf16.msra.mxu0 0
        %382 = vmatprep.subr.bf16.mxu0 0
        %383 = vmatpush1.bf16.msra.mxu0 0
        %384 = vmatprep.subr.bf16.mxu0 0
        %385 = vmatpush1.bf16.msra.mxu0 0
        %386 = vmatprep.subr.bf16.mxu0 0
        %387 = vmatpush1.bf16.msra.mxu0 0
        %388 = vmatprep.subr.bf16.mxu0 0
        %389 = vmatpush1.bf16.msra.mxu0 0
        %390 = vmatprep.subr.bf16.mxu0 0
        %391 = vmatpush1.bf16.msra.mxu0 0
        %392 = vmatprep.subr.bf16.mxu0 0
        %393 = vmatpush1.bf16.msra.mxu0 0
        %394 = vmatprep.subr.bf16.mxu0 0
        %395 = vmatpush1.bf16.msra.mxu0 0
        %396 = vmatprep.subr.bf16.mxu0 0
        %397 = vmatpush1.bf16.msra.mxu0 0
        %398 = vmatprep.mubr.bf16.mxu0 0
        %399 = vmatmul.mubr.bf16.gmra.mrb[0].mxu0 %v351
        %v400 = vpop.f32.mrb[0].mxu0
        %v401 = vadd.f32 %v302, %v400
        %v402 = vpop.f32.mrb[0].mxu0
        %v403 = vadd.f32 %v306, %v402
        %v404 = vpop.f32.mrb[0].mxu0
        %v405 = vpop.f32.mrb[0].mxu0
        %406 = vdwg.mxu0
        %407 = vmatprep.subr.bf16.mxu0 %v340
        %408 = vmatpush1.bf16.msra.mxu0 %v339
        %409 = vmatprep.subr.bf16.mxu0 %v364
        %410 = vmatpush1.bf16.msra.mxu0 %v361
        %411 = vmatprep.subr.bf16.mxu0 0
        %412 = vmatpush1.bf16.msra.mxu0 0
        %413 = vmatprep.subr.bf16.mxu0 0
        %414 = vmatpush1.bf16.msra.mxu0 0
        %415 = vmatprep.subr.bf16.mxu0 0
        %416 = vmatpush1.bf16.msra.mxu0 0
        %417 = vmatprep.subr.bf16.mxu0 0
        %418 = vmatpush1.bf16.msra.mxu0 0
        %419 = vmatprep.subr.bf16.mxu0 0
        %420 = vmatpush1.bf16.msra.mxu0 0
        %421 = vmatprep.subr.bf16.mxu0 0
        %422 = vmatpush1.bf16.msra.mxu0 0
        %423 = vmatprep.subr.bf16.mxu0 0
        %424 = vmatpush1.bf16.msra.mxu0 0
        %425 = vmatprep.subr.bf16.mxu0 0
        %426 = vmatpush1.bf16.msra.mxu0 0
        %427 = vmatprep.subr.bf16.mxu0 0
        %428 = vmatpush1.bf16.msra.mxu0 0
        %429 = vmatprep.subr.bf16.mxu0 0
        %430 = vmatpush1.bf16.msra.mxu0 0
        %431 = vmatprep.subr.bf16.mxu0 0
        %432 = vmatpush1.bf16.msra.mxu0 0
        %433 = vmatprep.subr.bf16.mxu0 0
        %434 = vmatpush1.bf16.msra.mxu0 0
        %435 = vmatprep.subr.bf16.mxu0 0
        %436 = vmatpush1.bf16.msra.mxu0 0
        %437 = vmatprep.subr.bf16.mxu0 0
        %438 = vmatpush1.bf16.msra.mxu0 0
        %439 = vmatprep.mubr.bf16.mxu0 0
        %440 = vmatmul.mubr.bf16.gmra.mrb[0].mxu0 %v351
        %v441 = vpop.f32.mrb[0].mxu0
        %v442 = vadd.f32 %v310, %v441
        %v443 = vpop.f32.mrb[0].mxu0
        %v444 = vadd.f32 %v314, %v443
        %v445 = vpop.f32.mrb[0].mxu0
        %v446 = vpop.f32.mrb[0].mxu0
        %447 = vdwg.mxu0
        %v448 = vmax.f32 %v401, 0.0
        %v449 = vmax.f32 %v403, 0.0
        %v450 = vmax.f32 %v442, 0.0
        %v451 = vmax.f32 %v444, 0.0
        %v452 = vpack.c.bf16 %v448, %v448
        %v453 = vpack.c.bf16 %v449, %v449
        %v454 = vpack.c.bf16 %v450, %v450
        %v455 = vpack.c.bf16 %v451, %v451
        %v456 = vld [vmem:[#allocation2] sm:$0xff]
        %v457 = vld [vmem:[#allocation2 + $0x8] sm:$0xff]
        %v458 = vld [vmem:[#allocation2 + $0x10] sm:$0xff]
        %v459 = vld [vmem:[#allocation2 + $0x18] sm:$0xff]
        %v460 = vld [vmem:[#allocation2 + $0x20] sm:$0xff]
        %v461 = vld [vmem:[#allocation2 + $0x28] sm:$0xff]
        %v462 = vld [vmem:[#allocation2 + $0x30] sm:$0xff]
        %v463 = vld [vmem:[#allocation2 + $0x38] sm:$0xff]
        %v464 = vld [vmem:[#allocation2 + $0x40] sm:$0xff]
        %v465 = vld [vmem:[#allocation2 + $0x48] sm:$0xff]
        %v466 = vld [vmem:[#allocation2 + $0x50] sm:$0xff]
        %v467 = vld [vmem:[#allocation2 + $0x58] sm:$0xff]
        %v468 = vld [vmem:[#allocation2 + $0x60] sm:$0xff]
        %v469 = vld [vmem:[#allocation2 + $0x68] sm:$0xff]
        %v470 = vld [vmem:[#allocation2 + $0x70] sm:$0xff]
        %v471 = vld [vmem:[#allocation2 + $0x78] sm:$0xff]
        %v472 = vld [vmem:[#allocation2 + $0x80] sm:$0xff]
        %v473 = vld [vmem:[#allocation2 + $0x88] sm:$0xff]
        %v474 = vld [vmem:[#allocation2 + $0x90] sm:$0xff]
        %v475 = vld [vmem:[#allocation2 + $0x98] sm:$0xff]
        %v476 = vld [vmem:[#allocation2 + $0xa0] sm:$0xff]
        %v477 = vld [vmem:[#allocation2 + $0xa8] sm:$0xff]
        %v478 = vld [vmem:[#allocation2 + $0xb0] sm:$0xff]
        %v479 = vld [vmem:[#allocation2 + $0xb8] sm:$0xff]
        %v480 = vld [vmem:[#allocation2 + $0xc0] sm:$0xff]
        %v481 = vld [vmem:[#allocation2 + $0xc8] sm:$0xff]
        %v482 = vld [vmem:[#allocation2 + $0xd0] sm:$0xff]
        %v483 = vld [vmem:[#allocation2 + $0xd8] sm:$0xff]
        %v484 = vld [vmem:[#allocation2 + $0xe0] sm:$0xff]
        %v485 = vld [vmem:[#allocation2 + $0xe8] sm:$0xff]
        %v486 = vld [vmem:[#allocation2 + $0xf0] sm:$0xff]
        %v487 = vld [vmem:[#allocation2 + $0xf8] sm:$0xff]
        %v488 = vld [vmem:[%s4] sm:$0x3]
        %v490 = vlaneseq
        %v491 = vshrl.u32 %v490, 7
        %v492 = vsub.s32 0, %v491
        %v493 = vrot.slane %v488, %v492
        %v494 = vlaneseq
        %v495 = vshrl.u32 %v494, 7
        %v496 = vsub.s32 1, %v495
        %v497 = vrot.slane %v488, %v496
        %v532 = vunpack.c.l.b16 %v456
        %v533 = vunpack.c.h.b16 %v456
        %v534 = vunpack.c.l.b16 %v457
        %v535 = vunpack.c.h.b16 %v457
        %v536 = vunpack.c.l.b16 %v458
        %v537 = vunpack.c.h.b16 %v458
        %v538 = vunpack.c.l.b16 %v459
        %v539 = vunpack.c.h.b16 %v459
        %v540 = vunpack.c.l.b16 %v460
        %v541 = vunpack.c.h.b16 %v460
        %v542 = vunpack.c.l.b16 %v461
        %v543 = vunpack.c.h.b16 %v461
        %v544 = vunpack.c.l.b16 %v462
        %v545 = vunpack.c.h.b16 %v462
        %v546 = vunpack.c.l.b16 %v463
        %v547 = vunpack.c.h.b16 %v463
        %v548 = vunpack.c.l.b16 %v464
        %v549 = vunpack.c.h.b16 %v464
        %v550 = vunpack.c.l.b16 %v465
        %v551 = vunpack.c.h.b16 %v465
        %v552 = vunpack.c.l.b16 %v466
        %v553 = vunpack.c.h.b16 %v466
        %v554 = vunpack.c.l.b16 %v467
        %v555 = vunpack.c.h.b16 %v467
        %v556 = vunpack.c.l.b16 %v468
        %v557 = vunpack.c.h.b16 %v468
        %v558 = vunpack.c.l.b16 %v469
        %v559 = vunpack.c.h.b16 %v469
        %v560 = vunpack.c.l.b16 %v470
        %v561 = vunpack.c.h.b16 %v470
        %v562 = vunpack.c.l.b16 %v471
        %v563 = vunpack.c.h.b16 %v471
        %v564 = vunpack.c.l.b16 %v472
        %v565 = vunpack.c.h.b16 %v472
        %v566 = vunpack.c.l.b16 %v473
        %v567 = vunpack.c.h.b16 %v473
        %v568 = vunpack.c.l.b16 %v474
        %v569 = vunpack.c.h.b16 %v474
        %v570 = vunpack.c.l.b16 %v475
        %v571 = vunpack.c.h.b16 %v475
        %v572 = vunpack.c.l.b16 %v476
        %v573 = vunpack.c.h.b16 %v476
        %v574 = vunpack.c.l.b16 %v477
        %v575 = vunpack.c.h.b16 %v477
        %v576 = vunpack.c.l.b16 %v478
        %v577 = vunpack.c.h.b16 %v478
        %v578 = vunpack.c.l.b16 %v479
        %v579 = vunpack.c.h.b16 %v479
        %v580 = vunpack.c.l.b16 %v480
        %v581 = vunpack.c.h.b16 %v480
        %v582 = vunpack.c.l.b16 %v481
        %v583 = vunpack.c.h.b16 %v481
        %v584 = vunpack.c.l.b16 %v482
        %v585 = vunpack.c.h.b16 %v482
        %v586 = vunpack.c.l.b16 %v483
        %v587 = vunpack.c.h.b16 %v483
        %v588 = vunpack.c.l.b16 %v484
        %v589 = vunpack.c.h.b16 %v484
        %v590 = vunpack.c.l.b16 %v485
        %v591 = vunpack.c.h.b16 %v485
        %v592 = vunpack.c.l.b16 %v486
        %v593 = vunpack.c.h.b16 %v486
        %v594 = vunpack.c.l.b16 %v487
        %v595 = vunpack.c.h.b16 %v487
        %v596 = vpack.c.b16 %v534, %v532
        %v597 = vpack.c.b16 %v535, %v533
        %v598 = vpack.c.b16 %v538, %v536
        %v599 = vpack.c.b16 %v539, %v537
        %v600 = vpack.c.b16 %v542, %v540
        %v601 = vpack.c.b16 %v543, %v541
        %v602 = vpack.c.b16 %v546, %v544
        %v603 = vpack.c.b16 %v547, %v545
        %v604 = vpack.c.b16 %v550, %v548
        %v605 = vpack.c.b16 %v551, %v549
        %v606 = vpack.c.b16 %v554, %v552
        %v607 = vpack.c.b16 %v555, %v553
        %v608 = vpack.c.b16 %v558, %v556
        %v609 = vpack.c.b16 %v559, %v557
        %v610 = vpack.c.b16 %v562, %v560
        %v611 = vpack.c.b16 %v563, %v561
        %v612 = vpack.c.b16 %v566, %v564
        %v613 = vpack.c.b16 %v567, %v565
        %v614 = vpack.c.b16 %v570, %v568
        %v615 = vpack.c.b16 %v571, %v569
        %v616 = vpack.c.b16 %v574, %v572
        %v617 = vpack.c.b16 %v575, %v573
        %v618 = vpack.c.b16 %v578, %v576
        %v619 = vpack.c.b16 %v579, %v577
        %v620 = vpack.c.b16 %v582, %v580
        %v621 = vpack.c.b16 %v583, %v581
        %v622 = vpack.c.b16 %v586, %v584
        %v623 = vpack.c.b16 %v587, %v585
        %v624 = vpack.c.b16 %v590, %v588
        %v625 = vpack.c.b16 %v591, %v589
        %v626 = vpack.c.b16 %v594, %v592
        %v627 = vpack.c.b16 %v595, %v593
        %660 = vmatprep.subr.bf16.mxu0 %v597
        %661 = vmatpush1.bf16.msra.mxu0 %v596
        %662 = vmatprep.subr.bf16.mxu0 %v599
        %663 = vmatpush1.bf16.msra.mxu0 %v598
        %664 = vmatprep.subr.bf16.mxu0 %v601
        %665 = vmatpush1.bf16.msra.mxu0 %v600
        %666 = vmatprep.subr.bf16.mxu0 %v603
        %667 = vmatpush1.bf16.msra.mxu0 %v602
        %668 = vmatprep.subr.bf16.mxu0 %v605
        %669 = vmatpush1.bf16.msra.mxu0 %v604
        %670 = vmatprep.subr.bf16.mxu0 %v607
        %671 = vmatpush1.bf16.msra.mxu0 %v606
        %672 = vmatprep.subr.bf16.mxu0 %v609
        %673 = vmatpush1.bf16.msra.mxu0 %v608
        %674 = vmatprep.subr.bf16.mxu0 %v611
        %675 = vmatpush1.bf16.msra.mxu0 %v610
        %676 = vmatprep.subr.bf16.mxu0 %v613
        %677 = vmatpush1.bf16.msra.mxu0 %v612
        %678 = vmatprep.subr.bf16.mxu0 %v615
        %679 = vmatpush1.bf16.msra.mxu0 %v614
        %680 = vmatprep.subr.bf16.mxu0 %v617
        %681 = vmatpush1.bf16.msra.mxu0 %v616
        %682 = vmatprep.subr.bf16.mxu0 %v619
        %683 = vmatpush1.bf16.msra.mxu0 %v618
        %684 = vmatprep.subr.bf16.mxu0 %v621
        %685 = vmatpush1.bf16.msra.mxu0 %v620
        %686 = vmatprep.subr.bf16.mxu0 %v623
        %687 = vmatpush1.bf16.msra.mxu0 %v622
        %688 = vmatprep.subr.bf16.mxu0 %v625
        %689 = vmatpush1.bf16.msra.mxu0 %v624
        %690 = vmatprep.subr.bf16.mxu0 %v627
        %691 = vmatpush1.bf16.msra.mxu0 %v626
        %692 = vmatprep.mubr.bf16.mxu0 %v453
        %693 = vmatmul.mubr.bf16.gmra.mrb[0].mxu0 %v452
        %v694 = vpop.f32.mrb[0].mxu0
        %v695 = vadd.f32 %v493, %v694
        %v696 = vpop.f32.mrb[0].mxu0
        %v697 = vadd.f32 %v497, %v696
        %v698 = vpop.f32.mrb[0].mxu0
        %v699 = vpop.f32.mrb[0].mxu0
        %700 = vdwg.mxu0
        %v701 = vmax.f32 %v695, 0.0
        %v702 = vmax.f32 %v697, 0.0
        %s703 = scalar_lea.vmem [#allocation2], 256
        %v704 = vld [vmem:[%s703] sm:$0xff]
        %v705 = vld [vmem:[%s703 + $0x8] sm:$0xff]
        %v706 = vld [vmem:[%s703 + $0x10] sm:$0xff]
        %v707 = vld [vmem:[%s703 + $0x18] sm:$0xff]
        %v708 = vld [vmem:[%s703 + $0x20] sm:$0xff]
        %v709 = vld [vmem:[%s703 + $0x28] sm:$0xff]
        %v710 = vld [vmem:[%s703 + $0x30] sm:$0xff]
        %v711 = vld [vmem:[%s703 + $0x38] sm:$0xff]
        %v712 = vld [vmem:[%s703 + $0x40] sm:$0xff]
        %v713 = vld [vmem:[%s703 + $0x48] sm:$0xff]
        %v714 = vld [vmem:[%s703 + $0x50] sm:$0xff]
        %v715 = vld [vmem:[%s703 + $0x58] sm:$0xff]
        %v716 = vld [vmem:[%s703 + $0x60] sm:$0xff]
        %v717 = vld [vmem:[%s703 + $0x68] sm:$0xff]
        %v718 = vld [vmem:[%s703 + $0x70] sm:$0xff]
        %v719 = vld [vmem:[%s703 + $0x78] sm:$0xff]
        %v720 = vld [vmem:[%s703 + $0x80] sm:$0xff]
        %v721 = vld [vmem:[%s703 + $0x88] sm:$0xff]
        %v722 = vld [vmem:[%s703 + $0x90] sm:$0xff]
        %v723 = vld [vmem:[%s703 + $0x98] sm:$0xff]
        %v724 = vld [vmem:[%s703 + $0xa0] sm:$0xff]
        %v725 = vld [vmem:[%s703 + $0xa8] sm:$0xff]
        %v726 = vld [vmem:[%s703 + $0xb0] sm:$0xff]
        %v727 = vld [vmem:[%s703 + $0xb8] sm:$0xff]
        %v728 = vld [vmem:[%s703 + $0xc0] sm:$0xff]
        %v729 = vld [vmem:[%s703 + $0xc8] sm:$0xff]
        %v730 = vld [vmem:[%s703 + $0xd0] sm:$0xff]
        %v731 = vld [vmem:[%s703 + $0xd8] sm:$0xff]
        %v732 = vld [vmem:[%s703 + $0xe0] sm:$0xff]
        %v733 = vld [vmem:[%s703 + $0xe8] sm:$0xff]
        %v734 = vld [vmem:[%s703 + $0xf0] sm:$0xff]
        %v735 = vld [vmem:[%s703 + $0xf8] sm:$0xff]
        %v736 = vld [vmem:[%s4 + $0x2] sm:$0x3]
        %v738 = vlaneseq
        %v739 = vshrl.u32 %v738, 7
        %v740 = vsub.s32 0, %v739
        %v741 = vrot.slane %v736, %v740
        %v742 = vlaneseq
        %v743 = vshrl.u32 %v742, 7
        %v744 = vsub.s32 1, %v743
        %v745 = vrot.slane %v736, %v744
        %v780 = vunpack.c.l.b16 %v704
        %v781 = vunpack.c.h.b16 %v704
        %v782 = vunpack.c.l.b16 %v705
        %v783 = vunpack.c.h.b16 %v705
        %v784 = vunpack.c.l.b16 %v706
        %v785 = vunpack.c.h.b16 %v706
        %v786 = vunpack.c.l.b16 %v707
        %v787 = vunpack.c.h.b16 %v707
        %v788 = vunpack.c.l.b16 %v708
        %v789 = vunpack.c.h.b16 %v708
        %v790 = vunpack.c.l.b16 %v709
        %v791 = vunpack.c.h.b16 %v709
        %v792 = vunpack.c.l.b16 %v710
        %v793 = vunpack.c.h.b16 %v710
        %v794 = vunpack.c.l.b16 %v711
        %v795 = vunpack.c.h.b16 %v711
        %v796 = vunpack.c.l.b16 %v712
        %v797 = vunpack.c.h.b16 %v712
        %v798 = vunpack.c.l.b16 %v713
        %v799 = vunpack.c.h.b16 %v713
        %v800 = vunpack.c.l.b16 %v714
        %v801 = vunpack.c.h.b16 %v714
        %v802 = vunpack.c.l.b16 %v715
        %v803 = vunpack.c.h.b16 %v715
        %v804 = vunpack.c.l.b16 %v716
        %v805 = vunpack.c.h.b16 %v716
        %v806 = vunpack.c.l.b16 %v717
        %v807 = vunpack.c.h.b16 %v717
        %v808 = vunpack.c.l.b16 %v718
        %v809 = vunpack.c.h.b16 %v718
        %v810 = vunpack.c.l.b16 %v719
        %v811 = vunpack.c.h.b16 %v719
        %v812 = vunpack.c.l.b16 %v720
        %v813 = vunpack.c.h.b16 %v720
        %v814 = vunpack.c.l.b16 %v721
        %v815 = vunpack.c.h.b16 %v721
        %v816 = vunpack.c.l.b16 %v722
        %v817 = vunpack.c.h.b16 %v722
        %v818 = vunpack.c.l.b16 %v723
        %v819 = vunpack.c.h.b16 %v723
        %v820 = vunpack.c.l.b16 %v724
        %v821 = vunpack.c.h.b16 %v724
        %v822 = vunpack.c.l.b16 %v725
        %v823 = vunpack.c.h.b16 %v725
        %v824 = vunpack.c.l.b16 %v726
        %v825 = vunpack.c.h.b16 %v726
        %v826 = vunpack.c.l.b16 %v727
        %v827 = vunpack.c.h.b16 %v727
        %v828 = vunpack.c.l.b16 %v728
        %v829 = vunpack.c.h.b16 %v728
        %v830 = vunpack.c.l.b16 %v729
        %v831 = vunpack.c.h.b16 %v729
        %v832 = vunpack.c.l.b16 %v730
        %v833 = vunpack.c.h.b16 %v730
        %v834 = vunpack.c.l.b16 %v731
        %v835 = vunpack.c.h.b16 %v731
        %v836 = vunpack.c.l.b16 %v732
        %v837 = vunpack.c.h.b16 %v732
        %v838 = vunpack.c.l.b16 %v733
        %v839 = vunpack.c.h.b16 %v733
        %v840 = vunpack.c.l.b16 %v734
        %v841 = vunpack.c.h.b16 %v734
        %v842 = vunpack.c.l.b16 %v735
        %v843 = vunpack.c.h.b16 %v735
        %v844 = vpack.c.b16 %v782, %v780
        %v845 = vpack.c.b16 %v783, %v781
        %v846 = vpack.c.b16 %v786, %v784
        %v847 = vpack.c.b16 %v787, %v785
        %v848 = vpack.c.b16 %v790, %v788
        %v849 = vpack.c.b16 %v791, %v789
        %v850 = vpack.c.b16 %v794, %v792
        %v851 = vpack.c.b16 %v795, %v793
        %v852 = vpack.c.b16 %v798, %v796
        %v853 = vpack.c.b16 %v799, %v797
        %v854 = vpack.c.b16 %v802, %v800
        %v855 = vpack.c.b16 %v803, %v801
        %v856 = vpack.c.b16 %v806, %v804
        %v857 = vpack.c.b16 %v807, %v805
        %v858 = vpack.c.b16 %v810, %v808
        %v859 = vpack.c.b16 %v811, %v809
        %v860 = vpack.c.b16 %v814, %v812
        %v861 = vpack.c.b16 %v815, %v813
        %v862 = vpack.c.b16 %v818, %v816
        %v863 = vpack.c.b16 %v819, %v817
        %v864 = vpack.c.b16 %v822, %v820
        %v865 = vpack.c.b16 %v823, %v821
        %v866 = vpack.c.b16 %v826, %v824
        %v867 = vpack.c.b16 %v827, %v825
        %v868 = vpack.c.b16 %v830, %v828
        %v869 = vpack.c.b16 %v831, %v829
        %v870 = vpack.c.b16 %v834, %v832
        %v871 = vpack.c.b16 %v835, %v833
        %v872 = vpack.c.b16 %v838, %v836
        %v873 = vpack.c.b16 %v839, %v837
        %v874 = vpack.c.b16 %v842, %v840
        %v875 = vpack.c.b16 %v843, %v841
        %908 = vmatprep.subr.bf16.mxu0 %v845
        %909 = vmatpush1.bf16.msra.mxu0 %v844
        %910 = vmatprep.subr.bf16.mxu0 %v847
        %911 = vmatpush1.bf16.msra.mxu0 %v846
        %912 = vmatprep.subr.bf16.mxu0 %v849
        %913 = vmatpush1.bf16.msra.mxu0 %v848
        %914 = vmatprep.subr.bf16.mxu0 %v851
        %915 = vmatpush1.bf16.msra.mxu0 %v850
        %916 = vmatprep.subr.bf16.mxu0 %v853
        %917 = vmatpush1.bf16.msra.mxu0 %v852
        %918 = vmatprep.subr.bf16.mxu0 %v855
        %919 = vmatpush1.bf16.msra.mxu0 %v854
        %920 = vmatprep.subr.bf16.mxu0 %v857
        %921 = vmatpush1.bf16.msra.mxu0 %v856
        %922 = vmatprep.subr.bf16.mxu0 %v859
        %923 = vmatpush1.bf16.msra.mxu0 %v858
        %924 = vmatprep.subr.bf16.mxu0 %v861
        %925 = vmatpush1.bf16.msra.mxu0 %v860
        %926 = vmatprep.subr.bf16.mxu0 %v863
        %927 = vmatpush1.bf16.msra.mxu0 %v862
        %928 = vmatprep.subr.bf16.mxu0 %v865
        %929 = vmatpush1.bf16.msra.mxu0 %v864
        %930 = vmatprep.subr.bf16.mxu0 %v867
        %931 = vmatpush1.bf16.msra.mxu0 %v866
        %932 = vmatprep.subr.bf16.mxu0 %v869
        %933 = vmatpush1.bf16.msra.mxu0 %v868
        %934 = vmatprep.subr.bf16.mxu0 %v871
        %935 = vmatpush1.bf16.msra.mxu0 %v870
        %936 = vmatprep.subr.bf16.mxu0 %v873
        %937 = vmatpush1.bf16.msra.mxu0 %v872
        %938 = vmatprep.subr.bf16.mxu0 %v875
        %939 = vmatpush1.bf16.msra.mxu0 %v874
        %940 = vmatprep.mubr.bf16.mxu0 %v455
        %941 = vmatmul.mubr.bf16.gmra.mrb[0].mxu0 %v454
        %v942 = vpop.f32.mrb[0].mxu0
        %v943 = vadd.f32 %v741, %v942
        %v944 = vpop.f32.mrb[0].mxu0
        %v945 = vadd.f32 %v745, %v944
        %v946 = vpop.f32.mrb[0].mxu0
        %v947 = vpop.f32.mrb[0].mxu0
        %948 = vdwg.mxu0
        %v949 = vmax.f32 %v943, 0.0
        %v950 = vmax.f32 %v945, 0.0
        %v951 = vld [vmem:[%s5] ss:$2 sm:$0x3]
        %v953 = vlaneseq
        %v954 = vshrl.u32 %v953, 7
        %v955 = vsub.s32 0, %v954
        %v956 = vrot.slane %v951, %v955
        %v957 = vlaneseq
        %v958 = vshrl.u32 %v957, 7
        %v959 = vsub.s32 1, %v958
        %v960 = vrot.slane %v951, %v959
        %v963 = vmul.f32 %v701, %v956
        %v964 = vmul.f32 %v702, %v960
        %v965 = vadd.f32 %v963, %v964
        %966 = vadd.xlane.f32.xlu0 %v965
        %v967 = vpop.xlane.xlu0 %966
        %s968 = scalar_lea.vmem %s5, 1
        %v969 = vld [vmem:[%s968] ss:$2 sm:$0x3]
        %v971 = vlaneseq
        %v972 = vshrl.u32 %v971, 7
        %v973 = vsub.s32 0, %v972
        %v974 = vrot.slane %v969, %v973
        %v975 = vlaneseq
        %v976 = vshrl.u32 %v975, 7
        %v977 = vsub.s32 1, %v976
        %v978 = vrot.slane %v969, %v977
        %v981 = vmul.f32 %v949, %v974
        %v982 = vmul.f32 %v950, %v978
        %v983 = vadd.f32 %v981, %v982
        %984 = vadd.xlane.f32.xlu0 %v983
        %v985 = vpop.xlane.xlu0 %984
        %vm986 = vcmask 7168
        %v987 = vsel %vm986, %v967, %v985
        %v988 = vld [vmem:[%s6] sm:$0x1]
        %v990 = vlaneseq
        %v991 = vshrl.u32 %v990, 7
        %v992 = vsub.s32 0, %v991
        %v993 = vrot.slane %v988, %v992
        %v995 = vadd.f32 %v987, %v993
        %vm996 = vcmask 15360
        %997 = vst.msk [vmem:[%s288] sm:$0xff] %vm996, %v995
        %p998 = scmp.lt.s32.totalorder %s19, 1
        %s999 = scalar_select %p998, %s19, 1
        %s1000 = smul.addr %s999, 8
        %s1001 = scalar_lea.vmem %s7, %s1000
        // Predicated region
        $region53: #{critic_forward.1} parent=47 // pred_check
          %p1002 = pneg %p189
        $region54: #{critic_forward.1} parent=47 // pred_check_branch
          %1004 = sbr.rel (%p1002) target = $region56
        $region55: #{critic_forward.1} parent=47 // pred_region
          _
        $region56: #{critic_forward.1} parent=47 // pred_fallthru
          _
      $region48: #{critic_forward.1} parent=5 // pred_fallthru
        _
      %p1005 = scmp.le.s32.totalorder 2, %s14
      // Predicated region
      $region57: #{critic_forward.1} parent=5 // pred_check
        %p1006 = pneg %p1005
      $region58: #{critic_forward.1} parent=5 // pred_check_branch
        %1008 = sbr.rel (%p1006) target = $region60
      $region59: #{critic_forward.1} parent=5 // pred_region
        %s1009 = ssub.s32 %s14, 2
        // Predicated region
        $region61: #{critic_forward.1} parent=59 // pred_check
          %p1010 = pneg %p195
        $region62: #{critic_forward.1} parent=59 // pred_check_branch
          %1012 = sbr.rel (%p1010) target = $region64
        $region63: #{critic_forward.1} parent=59 // pred_region
          %p1013 = scmp.lt.s32.totalorder %s20, 1
          %s1014 = scalar_select %p1013, %s20, 1
          %s1015 = smul.addr %s1014, 8
          %s1016 = scalar_lea.vmem %s7, %s1015
        $region64: #{critic_forward.1} parent=59 // pred_fallthru
          _
      $region60: #{critic_forward.1} parent=5 // pred_fallthru
        _
    $region6: #{critic_forward.1} parent=1 // loop_footer
      %s18 = sadd.s32 1, %s14
    $region7: #{critic_forward.1} parent=1 // loop_footer_branch
      %13 = sbr.rel target = $region3
    $region8: #{critic_forward.1} parent=1 // loop_exit
      _
    %1017 = vsyncpa [#allocation3], 1
    %s1018 = scalar_lea.sflag [#allocation3], 1
    %1019 = vsyncpa %s1018, 1

</llo_original>
